<compile_context>
chip_gen: v7x
topology: tpu7x:2x2x1
jax: 0.10.0
libtpu: 0.0.40
codegen_flags: <defaults>
</compile_context>

<pallas_src>
import functools

import jax
import jax.numpy as jnp
from jax.experimental import pallas as pl
from jax.experimental.pallas import tpu as pltpu

_LANE = 128                          # lane chunk width for in-register reduction
_MAX_TILE_COLS = 8192                # cap on tile width (keeps unrolled chunk loop <= 64)
_TARGET_TILE_BYTES = 2 * 1024 * 1024 # ~2 MiB per input tile (f32 accounting)


def _round_up(x, m):
    return ((x + m - 1) // m) * m


def _mse_with_logits_kernel(logits_ref, targets_ref, mask_ref, out_ref, *, n_valid):
    """One (B, tile_n) tile of the loss, reduced to a (1, B, 128) partial sum.

    out_ref is the per-parallel-chunk accumulator block: its block index depends only
    on the outer ("parallel") grid axis, so it stays resident across the inner
    ("arbitrary") axis and is written back to HBM once per chunk.
    """
    c = pl.program_id(0)          # parallel chunk (one per TensorCore on v7x)
    i = pl.program_id(1)          # step within the chunk

    @pl.when(i == 0)
    def _init():
        out_ref[...] = jnp.zeros_like(out_ref)

    b, tile_n = logits_ref.shape
    # Logical (unclamped) tile index -> global starting column of this tile.  The
    # index_map clamps the *data* fetch; validity is judged on the logical position,
    # so duplicated (clamped) tiles and the ragged tail both contribute exactly zero.
    col0 = (c * pl.num_programs(1) + i) * tile_n

    partial = jnp.zeros((b, _LANE), jnp.float32)
    for k in range(tile_n // _LANE):          # static unroll, <= 64 chunks
        lo, hi = k * _LANE, (k + 1) * _LANE
        x = logits_ref[:, lo:hi].astype(jnp.float32)
        t = targets_ref[:, lo:hi].astype(jnp.float32)
        m = mask_ref[:, lo:hi].astype(jnp.float32)

        gcol = col0 + lo + jax.lax.broadcasted_iota(jnp.int32, (b, _LANE), 1)
        valid = gcol < n_valid

        s = jax.nn.sigmoid(x)                 # EUP work, hidden under the DMA shadow
        d = s - t
        pos = (m == 1.0) & valid
        neg = (m == 0.0) & valid
        # Select (not multiply) so garbage/NaN in the out-of-bounds tail cannot leak.
        loss = jnp.where(pos, 5.0 * (d * d), jnp.where(neg, s * s, 0.0))
        partial = partial + loss

    out_ref[...] += partial[None]


def mse_with_logits_loss(logits, targets, mask, reduction="mean"):
    """Pallas TPU implementation of MSEWithLogitsLoss.forward (reduction='mean').

    Accepts logits/targets in any float dtype and mask in any dtype (f32/bf16/int8/bool);
    everything is streamed from HBM untouched and up-cast in-kernel.
    """
    assert reduction == "mean", "only 'mean' reduction implemented in the kernel"
    batch_size = logits.shape[0]

    # Flatten trailing dims (free for contiguous inputs; no data movement).
    lf = logits.reshape(batch_size, -1)
    tf = targets.reshape(batch_size, -1)
    mf = mask.reshape(batch_size, -1)
    n = lf.shape[1]

    # Tile width: multiple of 128 lanes, ~2 MiB per input (f32 accounting), capped.
    cols_needed = _round_up(n, _LANE)
    max_cols_by_vmem = max(_LANE, (_TARGET_TILE_BYTES // (4 * batch_size)) // _LANE * _LANE)
    tile_n = min(cols_needed, max_cols_by_vmem, _MAX_TILE_COLS)

    nb = pl.cdiv(n, tile_n)                 # real column tiles
    num_par = 2 if nb >= 2 else 1           # one chunk per v7x TensorCore; serial on v5e/v6e
    steps = pl.cdiv(nb, num_par)

    def in_map(c, i):
        # Clamp the data fetch for the (at most one) padding tile of the last chunk;
        # the kernel's logical-index validity mask zeroes its contribution.
        return (0, jnp.minimum(c * steps + i, nb - 1))

    tile_spec = pl.BlockSpec((batch_size, tile_n), in_map)

    out = pl.pallas_call(
        functools.partial(_mse_with_logits_kernel, n_valid=n),
        out_shape=jax.ShapeDtypeStruct((num_par, batch_size, _LANE), jnp.float32),
        grid=(num_par, steps),
        in_specs=[tile_spec, tile_spec, tile_spec],
        out_specs=pl.BlockSpec((1, batch_size, _LANE), lambda c, i: (c, 0, 0)),
        compiler_params=pltpu.CompilerParams(
            dimension_semantics=("parallel", "arbitrary"),
            vmem_limit_bytes=32 * 1024 * 1024,   # <= v7x's 64 MiB physical VMEM
        ),
        cost_estimate=pl.CostEstimate(
            flops=8 * lf.size,
            transcendentals=2 * lf.size,          # sigmoid may lower to exp + reciprocal
            bytes_accessed=lf.nbytes + tf.nbytes + mf.nbytes
                           + num_par * batch_size * _LANE * 4,
        ),
    )(lf, tf, mf)

    # Tiny (num_par * B * 128)-element reduction + mean normalization in the wrapper.
    return jnp.sum(out) / batch_size


def _reference(logits, targets, mask):
    inputs = jax.nn.sigmoid(logits.astype(jnp.float32))
    targets = targets.astype(jnp.float32)
    mask = mask.astype(jnp.float32)
    pos_id = (mask == 1.0).astype(jnp.float32)
    neg_id = (mask == 0.0).astype(jnp.float32)
    loss = 5.0 * pos_id * (inputs - targets) ** 2 + neg_id * inputs ** 2
    return jnp.sum(loss) / logits.shape[0]


if __name__ == "__main__":
    key = jax.random.PRNGKey(0)

    # Case 1: batch=2, 16x16 grid -> N=256 (lane-aligned), all-f32 streams.
    # Case 2: batch=2, 13x13 grid -> N=169 (ragged tail masked in-kernel), all-f32.
    # Case 3: batch=2, N=169 with bf16 logits/targets + int8 mask (narrow HBM streams).
    # Case 4: batch=2, N=20000 -> multiple tiles, 2 parallel chunks, clamped pad tile.
    cases = [
        (2, 256, jnp.float32, jnp.float32),
        (2, 169, jnp.float32, jnp.float32),
        (2, 169, jnp.bfloat16, jnp.int8),
        (2, 20000, jnp.float32, jnp.float32),
    ]
    for (B, N, val_dt, mask_dt) in cases:
        k1, k2, k3, key = jax.random.split(key, 4)
        logits = jax.random.normal(k1, (B, N), dtype=jnp.float32).astype(val_dt)
        targets = jax.random.uniform(k2, (B, N), dtype=jnp.float32).astype(val_dt)
        mask = (jax.random.uniform(k3, (B, N)) > 0.7).astype(mask_dt)

        out = mse_with_logits_loss(logits, targets, mask, reduction="mean")
        out = jax.block_until_ready(out)

        ref = _reference(logits, targets, mask)
        assert jnp.allclose(out, ref, rtol=1e-4, atol=1e-4), (B, N, out, ref)

    print("KERNEL_OK")
</pallas_src>

<mosaic_0001>
module attributes {stable_mosaic.version = 11 : i64} {
  func.func @_mse_with_logits_kernel(%arg0: i32, %arg1: i32, %arg2: memref<2x256xf32, #tpu.memory_space<vmem>>, %arg3: memref<2x256xf32, #tpu.memory_space<vmem>>, %arg4: memref<2x256xf32, #tpu.memory_space<vmem>>, %arg5: memref<1x2x128xf32, #tpu.memory_space<vmem>>) attributes {dimension_semantics = [#tpu.dimension_semantics<parallel>, #tpu.dimension_semantics<arbitrary>], iteration_bounds = array<i64: 1, 1>, scalar_prefetch = 0 : i64, scratch_operands = 0 : i64, tpu.core_type = #tpu.core_type<tc>, window_params = [{transform_indices = @transform_0, window_bounds = array<i64: 2, 256>}, {transform_indices = @transform_1, window_bounds = array<i64: 2, 256>}, {transform_indices = @transform_2, window_bounds = array<i64: 2, 256>}, {transform_indices = @transform_3, window_bounds = array<i64: 1, 2, 128>}]} {
    %c0_i32 = arith.constant 0 : i32
    %0 = arith.cmpi eq, %arg1, %c0_i32 : i32
    %1 = arith.extui %0 : i1 to i32
    %c0_i32_0 = arith.constant 0 : i32
    %2 = arith.cmpi ne, %1, %c0_i32_0 : i32
    scf.if %2 {
      %cst_30 = arith.constant 0.000000e+00 : f32
      %69 = vector.broadcast %cst_30 : f32 to vector<1x2x128xf32>
      %c0_31 = arith.constant 0 : index
      %c0_32 = arith.constant 0 : index
      %c0_33 = arith.constant 0 : index
      %70 = vector.load %arg5[%c0_31, %c0_32, %c0_33] : memref<1x2x128xf32, #tpu.memory_space<vmem>>, vector<1x2x128xf32>
      tpu.vector_store %arg5[%c0_31, %c0_32, %c0_33], %69 {strides = array<i32>} : memref<1x2x128xf32, #tpu.memory_space<vmem>>, vector<1x2x128xf32>,
    } else {
    }
    %c1_i32 = arith.constant 1 : i32
    %3 = arith.muli %arg0, %c1_i32 : i32
    %4 = arith.addi %3, %arg1 : i32
    %c256_i32 = arith.constant 256 : i32
    %5 = arith.muli %4, %c256_i32 : i32
    %cst = arith.constant 0.000000e+00 : f32
    %6 = vector.broadcast %cst : f32 to vector<2x128xf32>
    %c0 = arith.constant 0 : index
    %c0_1 = arith.constant 0 : index
    %7 = vector.load %arg2[%c0, %c0_1] : memref<2x256xf32, #tpu.memory_space<vmem>>, vector<2x128xf32>
    %c0_2 = arith.constant 0 : index
    %c0_3 = arith.constant 0 : index
    %8 = vector.load %arg3[%c0_2, %c0_3] : memref<2x256xf32, #tpu.memory_space<vmem>>, vector<2x128xf32>
    %c0_4 = arith.constant 0 : index
    %c0_5 = arith.constant 0 : index
    %9 = vector.load %arg4[%c0_4, %c0_5] : memref<2x256xf32, #tpu.memory_space<vmem>>, vector<2x128xf32>
    %c0_i32_6 = arith.constant 0 : i32
    %10 = arith.addi %5, %c0_i32_6 : i32
    %11 = tpu.iota {dimensions = array<i32: 1>} : vector<2x128xi32>
    %12 = vector.broadcast %10 : i32 to vector<2x128xi32>
    %13 = arith.addi %12, %11 : vector<2x128xi32>
    %c256_i32_7 = arith.constant 256 : i32
    %14 = vector.broadcast %c256_i32_7 : i32 to vector<2x128xi32>
    %15 = arith.cmpi slt, %13, %14 : vector<2x128xi32>
    %16 = arith.negf %7 : vector<2x128xf32>
    %17 = math.exp %16 : vector<2x128xf32>
    %cst_8 = arith.constant 1.000000e+00 : f32
    %18 = vector.broadcast %cst_8 : f32 to vector<2x128xf32>
    %19 = arith.addf %18, %17 : vector<2x128xf32>
    %20 = arith.divf %18, %19 : vector<2x128xf32>
    %21 = arith.subf %20, %8 : vector<2x128xf32>
    %cst_9 = arith.constant 1.000000e+00 : f32
    %22 = vector.broadcast %cst_9 : f32 to vector<2x128xf32>
    %23 = arith.cmpf oeq, %9, %22 : vector<2x128xf32>
    %24 = arith.andi %23, %15 : vector<2x128xi1>
    %cst_10 = arith.constant 0.000000e+00 : f32
    %25 = vector.broadcast %cst_10 : f32 to vector<2x128xf32>
    %26 = arith.cmpf oeq, %9, %25 : vector<2x128xf32>
    %27 = arith.andi %26, %15 : vector<2x128xi1>
    %28 = arith.mulf %21, %21 : vector<2x128xf32>
    %cst_11 = arith.constant 5.000000e+00 : f32
    %29 = vector.broadcast %cst_11 : f32 to vector<2x128xf32>
    %30 = arith.mulf %29, %28 : vector<2x128xf32>
    %31 = arith.mulf %20, %20 : vector<2x128xf32>
    %cst_12 = arith.constant 0.000000e+00 : f32
    %32 = vector.broadcast %cst_12 : f32 to vector<2x128xf32>
    %33 = arith.select %27, %31, %32 : vector<2x128xi1>, vector<2x128xf32>
    %34 = arith.select %24, %30, %33 : vector<2x128xi1>, vector<2x128xf32>
    %35 = arith.addf %6, %34 : vector<2x128xf32>
    %c0_13 = arith.constant 0 : index
    %c128 = arith.constant 128 : index
    %36 = vector.load %arg2[%c0_13, %c128] : memref<2x256xf32, #tpu.memory_space<vmem>>, vector<2x128xf32>
    %c0_14 = arith.constant 0 : index
    %c128_15 = arith.constant 128 : index
    %37 = vector.load %arg3[%c0_14, %c128_15] : memref<2x256xf32, #tpu.memory_space<vmem>>, vector<2x128xf32>
    %c0_16 = arith.constant 0 : index
    %c128_17 = arith.constant 128 : index
    %38 = vector.load %arg4[%c0_16, %c128_17] : memref<2x256xf32, #tpu.memory_space<vmem>>, vector<2x128xf32>
    %c128_i32 = arith.constant 128 : i32
    %39 = arith.addi %5, %c128_i32 : i32
    %40 = tpu.iota {dimensions = array<i32: 1>} : vector<2x128xi32>
    %41 = vector.broadcast %39 : i32 to vector<2x128xi32>
    %42 = arith.addi %41, %40 : vector<2x128xi32>
    %c256_i32_18 = arith.constant 256 : i32
    %43 = vector.broadcast %c256_i32_18 : i32 to vector<2x128xi32>
    %44 = arith.cmpi slt, %42, %43 : vector<2x128xi32>
    %45 = arith.negf %36 : vector<2x128xf32>
    %46 = math.exp %45 : vector<2x128xf32>
    %cst_19 = arith.constant 1.000000e+00 : f32
    %47 = vector.broadcast %cst_19 : f32 to vector<2x128xf32>
    %48 = arith.addf %47, %46 : vector<2x128xf32>
    %49 = arith.divf %47, %48 : vector<2x128xf32>
    %50 = arith.subf %49, %37 : vector<2x128xf32>
    %cst_20 = arith.constant 1.000000e+00 : f32
    %51 = vector.broadcast %cst_20 : f32 to vector<2x128xf32>
    %52 = arith.cmpf oeq, %38, %51 : vector<2x128xf32>
    %53 = arith.andi %52, %44 : vector<2x128xi1>
    %cst_21 = arith.constant 0.000000e+00 : f32
    %54 = vector.broadcast %cst_21 : f32 to vector<2x128xf32>
    %55 = arith.cmpf oeq, %38, %54 : vector<2x128xf32>
    %56 = arith.andi %55, %44 : vector<2x128xi1>
    %57 = arith.mulf %50, %50 : vector<2x128xf32>
    %cst_22 = arith.constant 5.000000e+00 : f32
    %58 = vector.broadcast %cst_22 : f32 to vector<2x128xf32>
    %59 = arith.mulf %58, %57 : vector<2x128xf32>
    %60 = arith.mulf %49, %49 : vector<2x128xf32>
    %cst_23 = arith.constant 0.000000e+00 : f32
    %61 = vector.broadcast %cst_23 : f32 to vector<2x128xf32>
    %62 = arith.select %56, %60, %61 : vector<2x128xi1>, vector<2x128xf32>
    %63 = arith.select %53, %59, %62 : vector<2x128xi1>, vector<2x128xf32>
    %64 = arith.addf %35, %63 : vector<2x128xf32>
    %c0_24 = arith.constant 0 : index
    %c0_25 = arith.constant 0 : index
    %c0_26 = arith.constant 0 : index
    %65 = vector.load %arg5[%c0_24, %c0_25, %c0_26] : memref<1x2x128xf32, #tpu.memory_space<vmem>>, vector<1x2x128xf32>
    %66 = vector.shape_cast %64 : vector<2x128xf32> to vector<1x2x128xf32>
    %67 = arith.addf %65, %66 : vector<1x2x128xf32>
    %c0_27 = arith.constant 0 : index
    %c0_28 = arith.constant 0 : index
    %c0_29 = arith.constant 0 : index
    %68 = vector.load %arg5[%c0_27, %c0_28, %c0_29] : memref<1x2x128xf32, #tpu.memory_space<vmem>>, vector<1x2x128xf32>
    tpu.vector_store %arg5[%c0_27, %c0_28, %c0_29], %67 {strides = array<i32>} : memref<1x2x128xf32, #tpu.memory_space<vmem>>, vector<1x2x128xf32>,
    return
  }
  func.func @transform_0(%arg0: i32, %arg1: i32) -> (i32, i32) {
    %c1_i32 = arith.constant 1 : i32
    %0 = arith.muli %arg0, %c1_i32 : i32
    %1 = arith.addi %0, %arg1 : i32
    %c0_i32 = arith.constant 0 : i32
    %2 = arith.minsi %1, %c0_i32 : i32
    %c0_i32_0 = arith.constant 0 : i32
    %c0_i32_1 = arith.constant 0 : i32
    return %c0_i32_0, %2 : i32, i32
  }
  func.func @transform_1(%arg0: i32, %arg1: i32) -> (i32, i32) {
    %c1_i32 = arith.constant 1 : i32
    %0 = arith.muli %arg0, %c1_i32 : i32
    %1 = arith.addi %0, %arg1 : i32
    %c0_i32 = arith.constant 0 : i32
    %2 = arith.minsi %1, %c0_i32 : i32
    %c0_i32_0 = arith.constant 0 : i32
    %c0_i32_1 = arith.constant 0 : i32
    return %c0_i32_0, %2 : i32, i32
  }
  func.func @transform_2(%arg0: i32, %arg1: i32) -> (i32, i32) {
    %c1_i32 = arith.constant 1 : i32
    %0 = arith.muli %arg0, %c1_i32 : i32
    %1 = arith.addi %0, %arg1 : i32
    %c0_i32 = arith.constant 0 : i32
    %2 = arith.minsi %1, %c0_i32 : i32
    %c0_i32_0 = arith.constant 0 : i32
    %c0_i32_1 = arith.constant 0 : i32
    return %c0_i32_0, %2 : i32, i32
  }
  func.func @transform_3(%arg0: i32, %arg1: i32) -> (i32, i32, i32) {
    %c0_i32 = arith.constant 0 : i32
    %c0_i32_0 = arith.constant 0 : i32
    %c0_i32_1 = arith.constant 0 : i32
    return %arg0, %c0_i32, %c0_i32_0 : i32, i32, i32
  }
}

</mosaic_0001>

<llo_original>
// kernel: tpu_custom_call.1
$region0: #{tpu_custom_call.1}
  #allocation0 [shape = 'u32[]', space=smem, size = 0x4, offset = 0x4, fixed_abs, tag = 'smem constant byte address 0x4 - core index']
  #allocation1 [shape = 'u32[144,128]{1,0:T(1,128)}', space=vmem, size = 0x12000, scoped, tag = 'internal scratch']
  %s0 = inlined_call_operand.hbm [shape: f32[2,256], index: 0, kind: input, shape index: {}]
  %s1 = inlined_call_operand.hbm [shape: f32[2,256], index: 1, kind: input, shape index: {}]
  %s2 = inlined_call_operand.vmem [shape: f32[2,256], index: 2, kind: input, shape index: {}]
  %s3 = inlined_call_operand.hbm [shape: f32[1,2,128], index: 3, kind: output, shape index: {}]
  %s4 = sld [smem:[#allocation0]]
  $region34: #{tpu_custom_call.1} parent=0
    _
  %s6 = ssub.s32 1, %s4
  %s7 = scalar_select 0, %s6, %s4
  $region1: #{tpu_custom_call.1} parent=0
    #allocation2 [shape = 'u8[2048]{0}', space=vmem, size = 0x800, scoped, tag = 'input window, operand 0, single buffered']
    #allocation3 [shape = 's32[1]{0}', space=sflag, size = 0x4, scoped, tag = 'scoped memory for tpu_custom_call.1']
    #allocation4 [shape = 's32[1]{0}', space=sflag, size = 0x4, scoped, tag = 'scoped memory for tpu_custom_call.1']
    #allocation5 [shape = 'u8[2048]{0}', space=vmem, size = 0x800, scoped, tag = 'input window, operand 1, single buffered']
    #allocation6 [shape = 's32[1]{0}', space=sflag, size = 0x4, scoped, tag = 'scoped memory for tpu_custom_call.1']
    #allocation7 [shape = 'u8[1024]{0}', space=vmem, size = 0x400, scoped, tag = 'output window, operand 0, single buffered']
    %8 = vsyncpa [#allocation3], 0
    %9 = vsyncpa [#allocation6], 0
    %10 = vsyncpa [#allocation4], 0
    // Predicated region
    $region2: #{tpu_custom_call.1} parent=1 // pred_check
      _
    $region3: #{tpu_custom_call.1} parent=1 // pred_check_branch
      %12 = sbr.rel (0) target = $region5
    $region4: #{tpu_custom_call.1} parent=1 // pred_region
      %s13 = sadd.s32 0, 0
      %p14 = scmp.lt.s32.totalorder %s13, 0
      %s15 = scalar_select %p14, %s13, 0
      %s16 = smul.u32 2, %s15
      %s18 = ssub.s32 64, 64
      %19 = vsyncadd [#allocation3], %s18
      %s20 = smul.addr %s16, 32
      %s21 = scalar_lea.hbm %s0, %s20
      %s23 = sshll.u32 [#allocation2], 4
      %s24 = int_to_ptr.vmem [resolvable:$true] %s23
      %26 = dma.hbm_to_vmem [thread:$0]  %s21, 64, %s24, [#allocation3]
    $region5: #{tpu_custom_call.1} parent=1 // pred_fallthru
      _
    // Predicated region
    $region6: #{tpu_custom_call.1} parent=1 // pred_check
      _
    $region7: #{tpu_custom_call.1} parent=1 // pred_check_branch
      %28 = sbr.rel (0) target = $region9
    $region8: #{tpu_custom_call.1} parent=1 // pred_region
      %s29 = sadd.s32 0, 0
      %p30 = scmp.lt.s32.totalorder %s29, 0
      %s31 = scalar_select %p30, %s29, 0
      %s32 = smul.u32 2, %s31
      %s34 = ssub.s32 64, 64
      %35 = vsyncadd [#allocation6], %s34
      %s36 = smul.addr %s32, 32
      %s37 = scalar_lea.hbm %s1, %s36
      %s39 = sshll.u32 [#allocation5], 4
      %s40 = int_to_ptr.vmem [resolvable:$true] %s39
      %42 = dma.hbm_to_vmem [thread:$0]  %s37, 64, %s40, [#allocation6]
    $region9: #{tpu_custom_call.1} parent=1 // pred_fallthru
      _
    // Predicated region
    $region10: #{tpu_custom_call.1} parent=1 // pred_check
      _
    $region11: #{tpu_custom_call.1} parent=1 // pred_check_branch
      %44 = sbr.rel (0) target = $region13
    $region12: #{tpu_custom_call.1} parent=1 // pred_region
      %s45 = sadd.s32 0, 0
      %p46 = scmp.lt.s32.totalorder %s45, 0
      %s47 = scalar_select %p46, %s45, 0
      %s48 = smul.u32 2, %s47
      %p49 = scmp.lt.s32.totalorder %s48, 1
      %s50 = scalar_select %p49, %s48, 1
      %s51 = smul.addr %s50, 2
      %s52 = scalar_lea.vmem %s2, %s51
      %s53 = sadd.s32 0, 0
      %p54 = scmp.lt.s32.totalorder %s53, 0
      %s55 = scalar_select %p54, %s53, 0
      %s56 = smul.u32 2, %s55
    $region13: #{tpu_custom_call.1} parent=1 // pred_fallthru
      _
    // Predicated region
    $region14: #{tpu_custom_call.1} parent=1 // pred_check
      _
    $region15: #{tpu_custom_call.1} parent=1 // pred_check_branch
      %58 = sbr.rel (0) target = $region17
    $region16: #{tpu_custom_call.1} parent=1 // pred_region
      %59 = dma.done [#allocation3], 64
    $region17: #{tpu_custom_call.1} parent=1 // pred_fallthru
      _
    // Predicated region
    $region18: #{tpu_custom_call.1} parent=1 // pred_check
      _
    $region19: #{tpu_custom_call.1} parent=1 // pred_check_branch
      %61 = sbr.rel (0) target = $region21
    $region20: #{tpu_custom_call.1} parent=1 // pred_region
      %62 = dma.done [#allocation6], 64
    $region21: #{tpu_custom_call.1} parent=1 // pred_fallthru
      _
    %s63 = sadd.s32 0, 0
    %p64 = scmp.lt.s32.totalorder %s63, 0
    %s65 = scalar_select %p64, %s63, 0
    %s66 = smul.u32 2, %s65
    %p67 = scmp.lt.s32.totalorder %s66, 1
    %s68 = scalar_select %p67, %s66, 1
    %s69 = smul.addr %s68, 2
    %s70 = scalar_lea.vmem %s2, %s69
    %s71 = sadd.s32 0, 0
    %p72 = scmp.lt.s32.totalorder %s71, 0
    %s73 = scalar_select %p72, %s71, 0
    %s74 = smul.u32 2, %s73
    %s75 = sadd.s32 0, 0
    %p76 = scmp.lt.s32.totalorder %s75, 0
    %s77 = scalar_select %p76, %s75, 0
    %s78 = smul.u32 2, %s77
    %s79 = sadd.s32 0, 0
    %p80 = scmp.lt.s32.totalorder %s79, 0
    %s81 = scalar_select %p80, %s79, 0
    %s82 = smul.u32 2, %s81
    %p83 = scmp.lt.s32.totalorder %s82, 1
    %s84 = scalar_select %p83, %s82, 1
    %s85 = smul.addr %s84, 2
    %s86 = scalar_lea.vmem %s2, %s85
    %s87 = sadd.s32 0, 0
    %p88 = scmp.lt.s32.totalorder %s87, 0
    %s89 = scalar_select %p88, %s87, 0
    %s90 = smul.u32 2, %s89
    %p91 = scmp.eq.s32.totalorder 0, 0
    // Predicated region
    $region22: #{tpu_custom_call.1} parent=1 // pred_check
      %p92 = pneg %p91
    $region23: #{tpu_custom_call.1} parent=1 // pred_check_branch
      %94 = sbr.rel (%p92) target = $region25
    $region24: #{tpu_custom_call.1} parent=1 // pred_region
      %95 = vst [vmem:[#allocation7] sm:$0x3] 0.0
    $region25: #{tpu_custom_call.1} parent=1 // pred_fallthru
      _
    %s96 = sadd.s32 0, 0
    %s97 = smul.u32 %s96, 256
    %v98 = vld [vmem:[#allocation2] sm:$0x3]
    %v99 = vld [vmem:[#allocation5] sm:$0x3]
    %v100 = vld [vmem:[%s86] sm:$0x3]
    %v101 = vlaneseq
    %v102 = vand.u32 %v101, 127
    %v103 = vstv %s97
    %v104 = vadd.s32 %v103, %v102
    %vm105 = vcmp.lt.s32.totalorder %v104, 256
    %v106 = vxor.u32 %v98, 2147483648
    %v107 = vmul.f32 %v106, 1.442695
    %v108 = vpow.pop %v107
    %v109 = vadd.f32 %v108, 1.0
    %v110 = vrcp.pop %v109
    %v111 = vmul.f32 1.0, %v110
    %v112 = vsub.f32 %v111, %v99
    %vm113 = vcmp.eq.f32.partialorder %v100, 1.0
    %vm114 = vmand %vm113, %vm105
    %vm115 = vcmp.eq.f32.partialorder %v100, 0.0
    %vm116 = vmand %vm115, %vm105
    %v117 = vmul.f32 %v112, %v112
    %v118 = vmul.f32 %v117, 5.0
    %v119 = vmul.f32 %v111, %v111
    %v120 = vsel %vm116, %v119, 0.0
    %v121 = vsel %vm114, %v118, %v120
    %v122 = vadd.f32 %v121, 0.0
    %v123 = vld [vmem:[#allocation2 + $0x2] sm:$0x3]
    %v124 = vld [vmem:[#allocation5 + $0x2] sm:$0x3]
    %v125 = vld [vmem:[%s86 + $0x2] sm:$0x3]
    %s126 = sadd.s32 %s97, 128
    %v127 = vstv %s126
    %v128 = vadd.s32 %v127, %v102
    %vm129 = vcmp.lt.s32.totalorder %v128, 256
    %v130 = vxor.u32 %v123, 2147483648
    %v131 = vmul.f32 %v130, 1.442695
    %v132 = vpow.pop %v131
    %v133 = vadd.f32 %v132, 1.0
    %v134 = vrcp.pop %v133
    %v135 = vmul.f32 1.0, %v134
    %v136 = vsub.f32 %v135, %v124
    %vm137 = vcmp.eq.f32.partialorder %v125, 1.0
    %vm138 = vmand %vm137, %vm129
    %vm139 = vcmp.eq.f32.partialorder %v125, 0.0
    %vm140 = vmand %vm139, %vm129
    %v141 = vmul.f32 %v136, %v136
    %v142 = vmul.f32 %v141, 5.0
    %v143 = vmul.f32 %v135, %v135
    %v144 = vsel %vm140, %v143, 0.0
    %v145 = vsel %vm138, %v142, %v144
    %v146 = vadd.f32 %v122, %v145
    %v147 = vld [vmem:[#allocation7] sm:$0x3]
    %v148 = vadd.f32 %v147, %v146
    %149 = vst [vmem:[#allocation7] sm:$0x3] %v148
    // Predicated region
    $region26: #{tpu_custom_call.1} parent=1 // pred_check
      _
    $region27: #{tpu_custom_call.1} parent=1 // pred_check_branch
      %151 = sbr.rel (0) target = $region29
    $region28: #{tpu_custom_call.1} parent=1 // pred_region
      %s153 = ssub.s32 32, 32
      %154 = vsyncadd [#allocation4], %s153
      %s156 = sshll.u32 [#allocation7], 4
      %s157 = int_to_ptr.vmem [resolvable:$true] %s156
      %159 = dma.vmem_to_hbm [thread:$0]  %s157, 32, %s3, [#allocation4]
    $region29: #{tpu_custom_call.1} parent=1 // pred_fallthru
      _
    // Predicated region
    $region30: #{tpu_custom_call.1} parent=1 // pred_check
      _
    $region31: #{tpu_custom_call.1} parent=1 // pred_check_branch
      %161 = sbr.rel (0) target = $region33
    $region32: #{tpu_custom_call.1} parent=1 // pred_region
      %162 = dma.done [#allocation4], 32
    $region33: #{tpu_custom_call.1} parent=1 // pred_fallthru
      _
    %163 = vsyncpa [#allocation3], 1
    %164 = vsyncpa [#allocation6], 1
    %165 = vsyncpa [#allocation4], 1

</llo_original>
